<compile_context>
chip_gen: v5e
topology: v5e:2x2
jax: 0.10.0
libtpu: 0.0.40
codegen_flags: <defaults>
</compile_context>

<pallas_src>
import functools
import math

import jax
import jax.numpy as jnp
from jax.experimental import pallas as pl
from jax.experimental.pallas import tpu as pltpu


def _round_up(v, m):
    return ((v + m - 1) // m) * m


def _conv3d_fused_kernel(x_ref, w_ref, b_ref, o_ref, acc_ref, *,
                         W, Ho, Wo, kH, kW):
    """One grid step = one (batch n, output depth do, depth tap kd).

    x_ref:   (1, 1, H*W + kW - 1, Cin)   one input depth slice (d = do + kd)
    w_ref:   (1, kH*kW, Cin, Cout_pad)   weights for the current depth tap kd
    b_ref:   (1, Cout_pad)               bias (invariant block)
    o_ref:   (1, 1, Ho, Wo, Cout_pad)    output slab for (n, do)
    acc_ref: (Ho*W, Cout_pad) f32        accumulator; rows with w >= Wo are
                                         junk from the flattened-shift trick
                                         and are simply never written out.
    """
    kd = pl.program_id(2)
    HoW = Ho * W

    @pl.when(kd == 0)
    def _():
        acc_ref[...] = jnp.zeros_like(acc_ref)

    acc = acc_ref[...]
    # Static (fully unrolled) loop over the in-plane taps.  For tap (kh, kw)
    # the flattened row ho*W + wo of the shifted slice is exactly input pixel
    # (ho + kh, wo + kw), so every tap accumulates at the same row alignment.
    for kh in range(kH):
        for kw in range(kW):
            off = kh * W + kw
            lhs = x_ref[0, 0, off:off + HoW, :]          # (Ho*W, Cin)
            rhs = w_ref[0, kh * kW + kw]                 # (Cin, Cout_pad)
            acc = acc + jnp.dot(lhs, rhs, preferred_element_type=jnp.float32)
    acc_ref[...] = acc

    @pl.when(kd == pl.num_programs(2) - 1)
    def _():
        b = b_ref[...]                                   # (1, Cout_pad)
        for ho in range(Ho):                             # static, Ho stores
            rows = acc_ref[ho * W:ho * W + Wo, :]        # (Wo, Cout_pad)
            o_ref[0, 0, ho, :, :] = (rows + b).astype(o_ref.dtype)


def conv3d_synapse_conn_forward(x_ncdhw, weight, bias, *, use_bf16=False):
    """Forward pass of Conv3dSynapseConn with step_mode='s'.

    x_ncdhw: [N, Cin, D, H, W]          (PyTorch NCDHW)
    weight:  [Cout, Cin, kD, kH, kW]    (PyTorch conv3d weight layout)
    bias:    [Cout]
    returns: [N, Cout, Dout, Hout, Wout]
    """
    N, Cin, D, H, W = x_ncdhw.shape
    Cout, _, kD, kH, kW = weight.shape
    Do, Ho, Wo = D - kD + 1, H - kH + 1, W - kW + 1
    out_dtype = x_ncdhw.dtype

    Cpad = _round_up(Cout, 128)          # lane-dense output / MXU N dim
    HWp = H * W + (kW - 1)               # halo rows so every tap slice fits
    HoW = Ho * W

    compute_dtype = jnp.bfloat16 if use_bf16 else x_ncdhw.dtype

    # ---- cheap glue (single pass over x; weight/bias are tiny) ----
    # channels-last, H and W flattened so kh/kw become pure row shifts.
    x_l = jnp.transpose(x_ncdhw, (0, 2, 3, 4, 1)).reshape(N, D, H * W, Cin)
    x_l = jnp.pad(x_l, ((0, 0), (0, 0), (0, kW - 1), (0, 0)))
    x_l = x_l.astype(compute_dtype)

    # weight -> (kD, kH*kW, Cin, Cout_pad), tap-major, zero-padded lanes.
    w_t = jnp.transpose(weight, (2, 3, 4, 1, 0)).reshape(kD, kH * kW, Cin, Cout)
    w_t = jnp.pad(w_t, ((0, 0), (0, 0), (0, 0), (0, Cpad - Cout)))
    w_t = w_t.astype(compute_dtype)

    b_p = jnp.pad(bias.astype(jnp.float32), (0, Cpad - Cout)).reshape(1, Cpad)

    kernel = functools.partial(_conv3d_fused_kernel,
                               W=W, Ho=Ho, Wo=Wo, kH=kH, kW=kW)

    out = pl.pallas_call(
        kernel,
        out_shape=jax.ShapeDtypeStruct((N, Do, Ho, Wo, Cpad), out_dtype),
        grid_spec=pltpu.PrefetchScalarGridSpec(
            num_scalar_prefetch=0,
            grid=(N, Do, kD),                      # kd = reduction, last
            in_specs=[
                # one input depth slice, shifted by the depth tap kd
                pl.BlockSpec((1, 1, HWp, Cin),
                             lambda n, do, kd: (n, do + kd, 0, 0)),
                # weights for the current depth tap only
                pl.BlockSpec((1, kH * kW, Cin, Cpad),
                             lambda n, do, kd: (kd, 0, 0, 0)),
                # bias: constant index_map -> invariant block, DMA elided
                pl.BlockSpec((1, Cpad), lambda n, do, kd: (0, 0)),
            ],
            out_specs=pl.BlockSpec((1, 1, Ho, Wo, Cpad),
                                   lambda n, do, kd: (n, do, 0, 0, 0)),
            scratch_shapes=[pltpu.VMEM((HoW, Cpad), jnp.float32)],
        ),
        compiler_params=pltpu.CompilerParams(
            dimension_semantics=("parallel", "parallel", "arbitrary"),
            vmem_limit_bytes=32 * 1024 * 1024,     # fits v7x's 64 MiB/TC VMEM
        ),
    )(x_l, w_t, b_p)

    out = out[..., :Cout]                          # drop Cout lane padding
    return jnp.transpose(out, (0, 4, 1, 2, 3))     # NDHWC -> NCDHW


if __name__ == "__main__":
    # Small, deterministic shapes: N=2, Cin=4, Cout=8, spatial 8^3, kernel 3^3.
    N, Cin, Cout = 2, 4, 8
    D = H = W = 8
    kD = kH = kW = 3

    key = jax.random.PRNGKey(0)
    kx, kw_, kb = jax.random.split(key, 3)

    x = jax.random.normal(kx, (N, Cin, D, H, W), dtype=jnp.float32)

    # Deterministic PyTorch-style Conv3d init (kaiming_uniform a=sqrt(5)):
    fan_in = Cin * kD * kH * kW
    bound = 1.0 / math.sqrt(fan_in)
    weight = jax.random.uniform(
        kw_, (Cout, Cin, kD, kH, kW), dtype=jnp.float32,
        minval=-bound, maxval=bound)
    bias = jax.random.uniform(
        kb, (Cout,), dtype=jnp.float32, minval=-bound, maxval=bound)

    y = conv3d_synapse_conn_forward(x, weight, bias)
    y = jax.block_until_ready(y)

    # Reference: XLA conv (matches torch.nn.Conv3d with default args).
    y_ref = jax.lax.conv_general_dilated(
        x, weight, window_strides=(1, 1, 1), padding="VALID",
        dimension_numbers=("NCDHW", "OIDHW", "NCDHW"),
    ) + bias.reshape(1, Cout, 1, 1, 1)

    assert y.shape == (N, Cout, D - kD + 1, H - kH + 1, W - kW + 1)
    assert jnp.allclose(y, y_ref, rtol=1e-4, atol=1e-4), "mismatch vs reference"
    print("KERNEL_OK")
</pallas_src>

<mosaic_0001>
module attributes {stable_mosaic.version = 11 : i64} {
  func.func @_conv3d_fused_kernel(%arg0: i32, %arg1: i32, %arg2: i32, %arg3: memref<1x1x66x4xf32, #tpu.memory_space<vmem>>, %arg4: memref<1x9x4x128xf32, #tpu.memory_space<vmem>>, %arg5: memref<1x128xf32, #tpu.memory_space<vmem>>, %arg6: memref<1x1x6x6x128xf32, #tpu.memory_space<vmem>>, %arg7: memref<48x128xf32, #tpu.memory_space<vmem>>) attributes {dimension_semantics = [#tpu.dimension_semantics<parallel>, #tpu.dimension_semantics<parallel>, #tpu.dimension_semantics<arbitrary>], iteration_bounds = array<i64: 2, 6, 3>, scalar_prefetch = 0 : i64, scratch_operands = 1 : i64, tpu.core_type = #tpu.core_type<tc>, window_params = [{transform_indices = @transform_0, window_bounds = array<i64: 1, 1, 66, 4>}, {transform_indices = @transform_1, window_bounds = array<i64: 1, 9, 4, 128>}, {pipeline_mode = #tpu.pipeline_mode<synchronous>, transform_indices = @transform_2, window_bounds = array<i64: 1, 128>}, {transform_indices = @transform_3, window_bounds = array<i64: 1, 1, 6, 6, 128>}]} {
    %c0_i32 = arith.constant 0 : i32
    %0 = arith.cmpi eq, %arg2, %c0_i32 : i32
    %1 = arith.extui %0 : i1 to i32
    %c0_i32_0 = arith.constant 0 : i32
    %2 = arith.cmpi ne, %1, %c0_i32_0 : i32
    scf.if %2 {
      %cst_72 = arith.constant 0.000000e+00 : f32
      %62 = vector.broadcast %cst_72 : f32 to vector<48x128xf32>
      %c0_73 = arith.constant 0 : index
      %c0_74 = arith.constant 0 : index
      %63 = vector.load %arg7[%c0_73, %c0_74] : memref<48x128xf32, #tpu.memory_space<vmem>>, vector<48x128xf32>
      tpu.vector_store %arg7[%c0_73, %c0_74], %62 {strides = array<i32>} : memref<48x128xf32, #tpu.memory_space<vmem>>, vector<48x128xf32>,
    } else {
    }
    %c0 = arith.constant 0 : index
    %c0_1 = arith.constant 0 : index
    %3 = vector.load %arg7[%c0, %c0_1] : memref<48x128xf32, #tpu.memory_space<vmem>>, vector<48x128xf32>
    %c0_2 = arith.constant 0 : index
    %c0_3 = arith.constant 0 : index
    %c0_4 = arith.constant 0 : index
    %c0_5 = arith.constant 0 : index
    %4 = vector.load %arg3[%c0_2, %c0_3, %c0_4, %c0_5] : memref<1x1x66x4xf32, #tpu.memory_space<vmem>>, vector<1x1x48x4xf32>
    %5 = vector.shape_cast %4 : vector<1x1x48x4xf32> to vector<48x4xf32>
    %c0_6 = arith.constant 0 : index
    %c0_7 = arith.constant 0 : index
    %c0_8 = arith.constant 0 : index
    %c0_9 = arith.constant 0 : index
    %6 = vector.load %arg4[%c0_6, %c0_7, %c0_8, %c0_9] : memref<1x9x4x128xf32, #tpu.memory_space<vmem>>, vector<1x1x4x128xf32>
    %7 = vector.shape_cast %6 : vector<1x1x4x128xf32> to vector<4x128xf32>
    %cst = arith.constant dense<0.000000e+00> : vector<48x128xf32>
    %8 = tpu.matmul %5, %7, %cst {dimension_numbers = #tpu.dot_dimension_numbers<[1], [0], [0], [1], [0, 0, 1, 1], [], []>} : vector<48x4xf32>, vector<4x128xf32>, vector<48x128xf32> -> vector<48x128xf32>
    %9 = arith.addf %3, %8 : vector<48x128xf32>
    %c0_10 = arith.constant 0 : index
    %c0_11 = arith.constant 0 : index
    %c1 = arith.constant 1 : index
    %c0_12 = arith.constant 0 : index
    %10 = vector.load %arg3[%c0_10, %c0_11, %c1, %c0_12] : memref<1x1x66x4xf32, #tpu.memory_space<vmem>>, vector<1x1x48x4xf32>
    %11 = vector.shape_cast %10 : vector<1x1x48x4xf32> to vector<48x4xf32>
    %c0_13 = arith.constant 0 : index
    %c1_14 = arith.constant 1 : index
    %c0_15 = arith.constant 0 : index
    %c0_16 = arith.constant 0 : index
    %12 = vector.load %arg4[%c0_13, %c1_14, %c0_15, %c0_16] : memref<1x9x4x128xf32, #tpu.memory_space<vmem>>, vector<1x1x4x128xf32>
    %13 = vector.shape_cast %12 : vector<1x1x4x128xf32> to vector<4x128xf32>
    %cst_17 = arith.constant dense<0.000000e+00> : vector<48x128xf32>
    %14 = tpu.matmul %11, %13, %cst_17 {dimension_numbers = #tpu.dot_dimension_numbers<[1], [0], [0], [1], [0, 0, 1, 1], [], []>} : vector<48x4xf32>, vector<4x128xf32>, vector<48x128xf32> -> vector<48x128xf32>
    %15 = arith.addf %9, %14 : vector<48x128xf32>
    %c0_18 = arith.constant 0 : index
    %c0_19 = arith.constant 0 : index
    %c2 = arith.constant 2 : index
    %c0_20 = arith.constant 0 : index
    %16 = vector.load %arg3[%c0_18, %c0_19, %c2, %c0_20] : memref<1x1x66x4xf32, #tpu.memory_space<vmem>>, vector<1x1x48x4xf32>
    %17 = vector.shape_cast %16 : vector<1x1x48x4xf32> to vector<48x4xf32>
    %c0_21 = arith.constant 0 : index
    %c2_22 = arith.constant 2 : index
    %c0_23 = arith.constant 0 : index
    %c0_24 = arith.constant 0 : index
    %18 = vector.load %arg4[%c0_21, %c2_22, %c0_23, %c0_24] : memref<1x9x4x128xf32, #tpu.memory_space<vmem>>, vector<1x1x4x128xf32>
    %19 = vector.shape_cast %18 : vector<1x1x4x128xf32> to vector<4x128xf32>
    %cst_25 = arith.constant dense<0.000000e+00> : vector<48x128xf32>
    %20 = tpu.matmul %17, %19, %cst_25 {dimension_numbers = #tpu.dot_dimension_numbers<[1], [0], [0], [1], [0, 0, 1, 1], [], []>} : vector<48x4xf32>, vector<4x128xf32>, vector<48x128xf32> -> vector<48x128xf32>
    %21 = arith.addf %15, %20 : vector<48x128xf32>
    %c0_26 = arith.constant 0 : index
    %c0_27 = arith.constant 0 : index
    %c8 = arith.constant 8 : index
    %c0_28 = arith.constant 0 : index
    %22 = vector.load %arg3[%c0_26, %c0_27, %c8, %c0_28] : memref<1x1x66x4xf32, #tpu.memory_space<vmem>>, vector<1x1x48x4xf32>
    %23 = vector.shape_cast %22 : vector<1x1x48x4xf32> to vector<48x4xf32>
    %c0_29 = arith.constant 0 : index
    %c3 = arith.constant 3 : index
    %c0_30 = arith.constant 0 : index
    %c0_31 = arith.constant 0 : index
    %24 = vector.load %arg4[%c0_29, %c3, %c0_30, %c0_31] : memref<1x9x4x128xf32, #tpu.memory_space<vmem>>, vector<1x1x4x128xf32>
    %25 = vector.shape_cast %24 : vector<1x1x4x128xf32> to vector<4x128xf32>
    %cst_32 = arith.constant dense<0.000000e+00> : vector<48x128xf32>
    %26 = tpu.matmul %23, %25, %cst_32 {dimension_numbers = #tpu.dot_dimension_numbers<[1], [0], [0], [1], [0, 0, 1, 1], [], []>} : vector<48x4xf32>, vector<4x128xf32>, vector<48x128xf32> -> vector<48x128xf32>
    %27 = arith.addf %21, %26 : vector<48x128xf32>
    %c0_33 = arith.constant 0 : index
    %c0_34 = arith.constant 0 : index
    %c9 = arith.constant 9 : index
    %c0_35 = arith.constant 0 : index
    %28 = vector.load %arg3[%c0_33, %c0_34, %c9, %c0_35] : memref<1x1x66x4xf32, #tpu.memory_space<vmem>>, vector<1x1x48x4xf32>
    %29 = vector.shape_cast %28 : vector<1x1x48x4xf32> to vector<48x4xf32>
    %c0_36 = arith.constant 0 : index
    %c4 = arith.constant 4 : index
    %c0_37 = arith.constant 0 : index
    %c0_38 = arith.constant 0 : index
    %30 = vector.load %arg4[%c0_36, %c4, %c0_37, %c0_38] : memref<1x9x4x128xf32, #tpu.memory_space<vmem>>, vector<1x1x4x128xf32>
    %31 = vector.shape_cast %30 : vector<1x1x4x128xf32> to vector<4x128xf32>
    %cst_39 = arith.constant dense<0.000000e+00> : vector<48x128xf32>
    %32 = tpu.matmul %29, %31, %cst_39 {dimension_numbers = #tpu.dot_dimension_numbers<[1], [0], [0], [1], [0, 0, 1, 1], [], []>} : vector<48x4xf32>, vector<4x128xf32>, vector<48x128xf32> -> vector<48x128xf32>
    %33 = arith.addf %27, %32 : vector<48x128xf32>
    %c0_40 = arith.constant 0 : index
    %c0_41 = arith.constant 0 : index
    %c10 = arith.constant 10 : index
    %c0_42 = arith.constant 0 : index
    %34 = vector.load %arg3[%c0_40, %c0_41, %c10, %c0_42] : memref<1x1x66x4xf32, #tpu.memory_space<vmem>>, vector<1x1x48x4xf32>
    %35 = vector.shape_cast %34 : vector<1x1x48x4xf32> to vector<48x4xf32>
    %c0_43 = arith.constant 0 : index
    %c5 = arith.constant 5 : index
    %c0_44 = arith.constant 0 : index
    %c0_45 = arith.constant 0 : index
    %36 = vector.load %arg4[%c0_43, %c5, %c0_44, %c0_45] : memref<1x9x4x128xf32, #tpu.memory_space<vmem>>, vector<1x1x4x128xf32>
    %37 = vector.shape_cast %36 : vector<1x1x4x128xf32> to vector<4x128xf32>
    %cst_46 = arith.constant dense<0.000000e+00> : vector<48x128xf32>
    %38 = tpu.matmul %35, %37, %cst_46 {dimension_numbers = #tpu.dot_dimension_numbers<[1], [0], [0], [1], [0, 0, 1, 1], [], []>} : vector<48x4xf32>, vector<4x128xf32>, vector<48x128xf32> -> vector<48x128xf32>
    %39 = arith.addf %33, %38 : vector<48x128xf32>
    %c0_47 = arith.constant 0 : index
    %c0_48 = arith.constant 0 : index
    %c16 = arith.constant 16 : index
    %c0_49 = arith.constant 0 : index
    %40 = vector.load %arg3[%c0_47, %c0_48, %c16, %c0_49] : memref<1x1x66x4xf32, #tpu.memory_space<vmem>>, vector<1x1x48x4xf32>
    %41 = vector.shape_cast %40 : vector<1x1x48x4xf32> to vector<48x4xf32>
    %c0_50 = arith.constant 0 : index
    %c6 = arith.constant 6 : index
    %c0_51 = arith.constant 0 : index
    %c0_52 = arith.constant 0 : index
    %42 = vector.load %arg4[%c0_50, %c6, %c0_51, %c0_52] : memref<1x9x4x128xf32, #tpu.memory_space<vmem>>, vector<1x1x4x128xf32>
    %43 = vector.shape_cast %42 : vector<1x1x4x128xf32> to vector<4x128xf32>
    %cst_53 = arith.constant dense<0.000000e+00> : vector<48x128xf32>
    %44 = tpu.matmul %41, %43, %cst_53 {dimension_numbers = #tpu.dot_dimension_numbers<[1], [0], [0], [1], [0, 0, 1, 1], [], []>} : vector<48x4xf32>, vector<4x128xf32>, vector<48x128xf32> -> vector<48x128xf32>
    %45 = arith.addf %39, %44 : vector<48x128xf32>
    %c0_54 = arith.constant 0 : index
    %c0_55 = arith.constant 0 : index
    %c17 = arith.constant 17 : index
    %c0_56 = arith.constant 0 : index
    %46 = vector.load %arg3[%c0_54, %c0_55, %c17, %c0_56] : memref<1x1x66x4xf32, #tpu.memory_space<vmem>>, vector<1x1x48x4xf32>
    %47 = vector.shape_cast %46 : vector<1x1x48x4xf32> to vector<48x4xf32>
    %c0_57 = arith.constant 0 : index
    %c7 = arith.constant 7 : index
    %c0_58 = arith.constant 0 : index
    %c0_59 = arith.constant 0 : index
    %48 = vector.load %arg4[%c0_57, %c7, %c0_58, %c0_59] : memref<1x9x4x128xf32, #tpu.memory_space<vmem>>, vector<1x1x4x128xf32>
    %49 = vector.shape_cast %48 : vector<1x1x4x128xf32> to vector<4x128xf32>
    %cst_60 = arith.constant dense<0.000000e+00> : vector<48x128xf32>
    %50 = tpu.matmul %47, %49, %cst_60 {dimension_numbers = #tpu.dot_dimension_numbers<[1], [0], [0], [1], [0, 0, 1, 1], [], []>} : vector<48x4xf32>, vector<4x128xf32>, vector<48x128xf32> -> vector<48x128xf32>
    %51 = arith.addf %45, %50 : vector<48x128xf32>
    %c0_61 = arith.constant 0 : index
    %c0_62 = arith.constant 0 : index
    %c18 = arith.constant 18 : index
    %c0_63 = arith.constant 0 : index
    %52 = vector.load %arg3[%c0_61, %c0_62, %c18, %c0_63] : memref<1x1x66x4xf32, #tpu.memory_space<vmem>>, vector<1x1x48x4xf32>
    %53 = vector.shape_cast %52 : vector<1x1x48x4xf32> to vector<48x4xf32>
    %c0_64 = arith.constant 0 : index
    %c8_65 = arith.constant 8 : index
    %c0_66 = arith.constant 0 : index
    %c0_67 = arith.constant 0 : index
    %54 = vector.load %arg4[%c0_64, %c8_65, %c0_66, %c0_67] : memref<1x9x4x128xf32, #tpu.memory_space<vmem>>, vector<1x1x4x128xf32>
    %55 = vector.shape_cast %54 : vector<1x1x4x128xf32> to vector<4x128xf32>
    %cst_68 = arith.constant dense<0.000000e+00> : vector<48x128xf32>
    %56 = tpu.matmul %53, %55, %cst_68 {dimension_numbers = #tpu.dot_dimension_numbers<[1], [0], [0], [1], [0, 0, 1, 1], [], []>} : vector<48x4xf32>, vector<4x128xf32>, vector<48x128xf32> -> vector<48x128xf32>
    %57 = arith.addf %51, %56 : vector<48x128xf32>
    %c0_69 = arith.constant 0 : index
    %c0_70 = arith.constant 0 : index
    %58 = vector.load %arg7[%c0_69, %c0_70] : memref<48x128xf32, #tpu.memory_space<vmem>>, vector<48x128xf32>
    tpu.vector_store %arg7[%c0_69, %c0_70], %57 {strides = array<i32>} : memref<48x128xf32, #tpu.memory_space<vmem>>, vector<48x128xf32>,
    %c2_i32 = arith.constant 2 : i32
    %59 = arith.cmpi eq, %arg2, %c2_i32 : i32
    %60 = arith.extui %59 : i1 to i32
    %c0_i32_71 = arith.constant 0 : i32
    %61 = arith.cmpi ne, %60, %c0_i32_71 : i32
    scf.if %61 {
      %c0_72 = arith.constant 0 : index
      %c0_73 = arith.constant 0 : index
      %62 = vector.load %arg5[%c0_72, %c0_73] : memref<1x128xf32, #tpu.memory_space<vmem>>, vector<1x128xf32>
      %c0_74 = arith.constant 0 : index
      %c0_75 = arith.constant 0 : index
      %63 = vector.load %arg7[%c0_74, %c0_75] : memref<48x128xf32, #tpu.memory_space<vmem>>, vector<6x128xf32>
      %64 = vector.broadcast %62 : vector<1x128xf32> to vector<6x128xf32>
      %65 = arith.addf %63, %64 : vector<6x128xf32>
      %c0_76 = arith.constant 0 : index
      %c0_77 = arith.constant 0 : index
      %c0_78 = arith.constant 0 : index
      %c0_79 = arith.constant 0 : index
      %c0_80 = arith.constant 0 : index
      %66 = vector.load %arg6[%c0_76, %c0_77, %c0_78, %c0_79, %c0_80] : memref<1x1x6x6x128xf32, #tpu.memory_space<vmem>>, vector<1x1x1x6x128xf32>
      %67 = vector.shape_cast %66 : vector<1x1x1x6x128xf32> to vector<6x128xf32>
      %68 = vector.shape_cast %65 : vector<6x128xf32> to vector<1x1x1x6x128xf32>
      tpu.vector_store %arg6[%c0_76, %c0_77, %c0_78, %c0_79, %c0_80], %68 {strides = array<i32>} : memref<1x1x6x6x128xf32, #tpu.memory_space<vmem>>, vector<1x1x1x6x128xf32>,
      %c8_81 = arith.constant 8 : index
      %c0_82 = arith.constant 0 : index
      %69 = vector.load %arg7[%c8_81, %c0_82] : memref<48x128xf32, #tpu.memory_space<vmem>>, vector<6x128xf32>
      %70 = vector.broadcast %62 : vector<1x128xf32> to vector<6x128xf32>
      %71 = arith.addf %69, %70 : vector<6x128xf32>
      %c0_83 = arith.constant 0 : index
      %c0_84 = arith.constant 0 : index
      %c1_85 = arith.constant 1 : index
      %c0_86 = arith.constant 0 : index
      %c0_87 = arith.constant 0 : index
      %72 = vector.load %arg6[%c0_83, %c0_84, %c1_85, %c0_86, %c0_87] : memref<1x1x6x6x128xf32, #tpu.memory_space<vmem>>, vector<1x1x1x6x128xf32>
      %73 = vector.shape_cast %72 : vector<1x1x1x6x128xf32> to vector<6x128xf32>
      %74 = vector.shape_cast %71 : vector<6x128xf32> to vector<1x1x1x6x128xf32>
      tpu.vector_store %arg6[%c0_83, %c0_84, %c1_85, %c0_86, %c0_87], %74 {strides = array<i32>} : memref<1x1x6x6x128xf32, #tpu.memory_space<vmem>>, vector<1x1x1x6x128xf32>,
      %c16_88 = arith.constant 16 : index
      %c0_89 = arith.constant 0 : index
      %75 = vector.load %arg7[%c16_88, %c0_89] : memref<48x128xf32, #tpu.memory_space<vmem>>, vector<6x128xf32>
      %76 = vector.broadcast %62 : vector<1x128xf32> to vector<6x128xf32>
      %77 = arith.addf %75, %76 : vector<6x128xf32>
      %c0_90 = arith.constant 0 : index
      %c0_91 = arith.constant 0 : index
      %c2_92 = arith.constant 2 : index
      %c0_93 = arith.constant 0 : index
      %c0_94 = arith.constant 0 : index
      %78 = vector.load %arg6[%c0_90, %c0_91, %c2_92, %c0_93, %c0_94] : memref<1x1x6x6x128xf32, #tpu.memory_space<vmem>>, vector<1x1x1x6x128xf32>
      %79 = vector.shape_cast %78 : vector<1x1x1x6x128xf32> to vector<6x128xf32>
      %80 = vector.shape_cast %77 : vector<6x128xf32> to vector<1x1x1x6x128xf32>
      tpu.vector_store %arg6[%c0_90, %c0_91, %c2_92, %c0_93, %c0_94], %80 {strides = array<i32>} : memref<1x1x6x6x128xf32, #tpu.memory_space<vmem>>, vector<1x1x1x6x128xf32>,
      %c24 = arith.constant 24 : index
      %c0_95 = arith.constant 0 : index
      %81 = vector.load %arg7[%c24, %c0_95] : memref<48x128xf32, #tpu.memory_space<vmem>>, vector<6x128xf32>
      %82 = vector.broadcast %62 : vector<1x128xf32> to vector<6x128xf32>
      %83 = arith.addf %81, %82 : vector<6x128xf32>
      %c0_96 = arith.constant 0 : index
      %c0_97 = arith.constant 0 : index
      %c3_98 = arith.constant 3 : index
      %c0_99 = arith.constant 0 : index
      %c0_100 = arith.constant 0 : index
      %84 = vector.load %arg6[%c0_96, %c0_97, %c3_98, %c0_99, %c0_100] : memref<1x1x6x6x128xf32, #tpu.memory_space<vmem>>, vector<1x1x1x6x128xf32>
      %85 = vector.shape_cast %84 : vector<1x1x1x6x128xf32> to vector<6x128xf32>
      %86 = vector.shape_cast %83 : vector<6x128xf32> to vector<1x1x1x6x128xf32>
      tpu.vector_store %arg6[%c0_96, %c0_97, %c3_98, %c0_99, %c0_100], %86 {strides = array<i32>} : memref<1x1x6x6x128xf32, #tpu.memory_space<vmem>>, vector<1x1x1x6x128xf32>,
      %c32 = arith.constant 32 : index
      %c0_101 = arith.constant 0 : index
      %87 = vector.load %arg7[%c32, %c0_101] : memref<48x128xf32, #tpu.memory_space<vmem>>, vector<6x128xf32>
      %88 = vector.broadcast %62 : vector<1x128xf32> to vector<6x128xf32>
      %89 = arith.addf %87, %88 : vector<6x128xf32>
      %c0_102 = arith.constant 0 : index
      %c0_103 = arith.constant 0 : index
      %c4_104 = arith.constant 4 : index
      %c0_105 = arith.constant 0 : index
      %c0_106 = arith.constant 0 : index
      %90 = vector.load %arg6[%c0_102, %c0_103, %c4_104, %c0_105, %c0_106] : memref<1x1x6x6x128xf32, #tpu.memory_space<vmem>>, vector<1x1x1x6x128xf32>
      %91 = vector.shape_cast %90 : vector<1x1x1x6x128xf32> to vector<6x128xf32>
      %92 = vector.shape_cast %89 : vector<6x128xf32> to vector<1x1x1x6x128xf32>
      tpu.vector_store %arg6[%c0_102, %c0_103, %c4_104, %c0_105, %c0_106], %92 {strides = array<i32>} : memref<1x1x6x6x128xf32, #tpu.memory_space<vmem>>, vector<1x1x1x6x128xf32>,
      %c40 = arith.constant 40 : index
      %c0_107 = arith.constant 0 : index
      %93 = vector.load %arg7[%c40, %c0_107] : memref<48x128xf32, #tpu.memory_space<vmem>>, vector<6x128xf32>
      %94 = vector.broadcast %62 : vector<1x128xf32> to vector<6x128xf32>
      %95 = arith.addf %93, %94 : vector<6x128xf32>
      %c0_108 = arith.constant 0 : index
      %c0_109 = arith.constant 0 : index
      %c5_110 = arith.constant 5 : index
      %c0_111 = arith.constant 0 : index
      %c0_112 = arith.constant 0 : index
      %96 = vector.load %arg6[%c0_108, %c0_109, %c5_110, %c0_111, %c0_112] : memref<1x1x6x6x128xf32, #tpu.memory_space<vmem>>, vector<1x1x1x6x128xf32>
      %97 = vector.shape_cast %96 : vector<1x1x1x6x128xf32> to vector<6x128xf32>
      %98 = vector.shape_cast %95 : vector<6x128xf32> to vector<1x1x1x6x128xf32>
      tpu.vector_store %arg6[%c0_108, %c0_109, %c5_110, %c0_111, %c0_112], %98 {strides = array<i32>} : memref<1x1x6x6x128xf32, #tpu.memory_space<vmem>>, vector<1x1x1x6x128xf32>,
    } else {
    }
    return
  }
  func.func @transform_0(%arg0: i32, %arg1: i32, %arg2: i32) -> (i32, i32, i32, i32) {
    %0 = arith.addi %arg1, %arg2 : i32
    %c0_i32 = arith.constant 0 : i32
    %c0_i32_0 = arith.constant 0 : i32
    %c0_i32_1 = arith.constant 0 : i32
    return %arg0, %0, %c0_i32, %c0_i32_0 : i32, i32, i32, i32
  }
  func.func @transform_1(%arg0: i32, %arg1: i32, %arg2: i32) -> (i32, i32, i32, i32) {
    %c0_i32 = arith.constant 0 : i32
    %c0_i32_0 = arith.constant 0 : i32
    %c0_i32_1 = arith.constant 0 : i32
    %c0_i32_2 = arith.constant 0 : i32
    return %arg2, %c0_i32, %c0_i32_0, %c0_i32_1 : i32, i32, i32, i32
  }
  func.func @transform_2(%arg0: i32, %arg1: i32, %arg2: i32) -> (i32, i32) {
    %c0_i32 = arith.constant 0 : i32
    %c0_i32_0 = arith.constant 0 : i32
    %c0_i32_1 = arith.constant 0 : i32
    return %c0_i32, %c0_i32_0 : i32, i32
  }
  func.func @transform_3(%arg0: i32, %arg1: i32, %arg2: i32) -> (i32, i32, i32, i32, i32) {
    %c0_i32 = arith.constant 0 : i32
    %c0_i32_0 = arith.constant 0 : i32
    %c0_i32_1 = arith.constant 0 : i32
    %c0_i32_2 = arith.constant 0 : i32
    return %arg0, %arg1, %c0_i32, %c0_i32_0, %c0_i32_1 : i32, i32, i32, i32, i32
  }
}

</mosaic_0001>

<llo_original>
// kernel: tpu_custom_call.1
$region0: #{tpu_custom_call.1}
  #allocation0 [shape = 'u32[]', space=smem, size = 0x4, offset = 0x4, fixed_abs, tag = 'smem constant byte address 0x4 - core index']
  #allocation1 [shape = 'u32[72,128]{1,0:T(1,128)}', space=vmem, size = 0x9000, scoped, tag = 'internal scratch']
  #allocation2 [shape = 'f32[48,128]{1,0:T(8,128)}', space=vmem, size = 0x6000, scoped, tag = 'scratch operand']
  %s0 = inlined_call_operand.vmem [shape: f32[2,8,66,4], index: 0, kind: input, shape index: {}]
  %s1 = inlined_call_operand.vmem [shape: f32[3,9,4,128], index: 1, kind: input, shape index: {}]
  %s2 = inlined_call_operand.vmem [shape: f32[1,128], index: 2, kind: input, shape index: {}]
  %s3 = inlined_call_operand.vmem [shape: f32[2,6,6,6,128], index: 3, kind: output, shape index: {}]
  %s4 = sld [smem:[#allocation0]]
  $region53: #{tpu_custom_call.1} parent=0
    _
  %s6 = ssub.s32 1, %s4
  %s7 = scalar_select 0, %s6, %s4
  loop: start=0, step=1, limit=38
  $region2: #{tpu_custom_call.1} parent=0 // loop_pre_header
    _
  $region3: #{tpu_custom_call.1} parent=0 // loop_header
    %s9 = sphi 0, %s13
    %p10 = scmp.ge.s32.totalorder %s9, 38
    %s16 = sphi 0, %s35
    %s17 = sphi 0, %s31
    %s18 = sphi 0, %s27
    %s19 = sphi 0, %s16
    %s20 = sphi 0, %s17
    %s21 = sphi 0, %s18
    %s22 = sphi 0, %s19
    %s23 = sphi 0, %s20
    %s24 = sphi 0, %s21
    %s42 = sphi 0, %s44
    %s45 = sphi 0, %s42
    %s46 = sphi 0, %s45
    %s62 = sphi 0, %s46
    %s68 = sphi 0, %s70
    %s71 = sphi 0, %s68
    %s72 = sphi 0, %s71
    %s88 = sphi 0, %s72
    %s92 = sphi 0, %s92
    %s94 = sphi 0, %s92
    %s95 = sphi 0, %s94
    %s109 = sphi 0, %s95
    %s117 = sphi 0, %s119
    %s120 = sphi 0, %s117
    %s121 = sphi 0, %s120
    %s137 = sphi 0, %s121
  $region4: #{tpu_custom_call.1} parent=0 // loop_header_branch
    %12 = sbr.rel (%p10) target = $region8
  $region5: #{tpu_custom_call.1} parent=0 // loop_body
    %s14 = ssub.s32 %s9, 1
    %s15 = ssub.s32 %s9, 2
    %s25 = sadd.s32 1, %s18
    %p26 = scmp.ge.s32.totalorder %s25, 3
    %s27 = scalar_select %p26, 0, %s25
    %s28 = sadd.s32 1, %s17
    %s29 = scalar_select %p26, %s28, %s17
    %p30 = scmp.ge.s32.totalorder %s29, 6
    %s31 = scalar_select %p30, 0, %s29
    %s32 = sadd.s32 1, %s16
    %s33 = scalar_select %p30, %s32, %s16
    %p34 = scmp.ge.s32.totalorder %s33, 2
    %s35 = scalar_select %p34, 0, %s33
    %s36 = sadd.s32 %s17, %s18
    %s37 = sadd.s32 %s31, %s27
    %s38 = ssub.s32 %s16, %s35
    %s39 = ssub.s32 %s36, %s37
    %s40 = sor.u32 %s38, %s39
    %p41 = scmp.eq.s32.totalorder %s40, 0
    %s43 = sadd.s32 %s42, 1
    %s44 = scalar_select %p41, %s42, %s43
    %p47 = pneg %p41
    %p48 = scmp.eq.s32.totalorder %s9, 35
    %p49 = por %p47, %p48
    %p50 = scmp.ne.s32.totalorder %s42, %s45
    %p51 = scmp.eq.s32.totalorder %s9, 0
    %p52 = por %p50, %p51
    %p53 = scmp.ne.s32.totalorder %s42, %s45
    %p54 = scmp.eq.s32.totalorder %s14, 35
    %p55 = por %p53, %p54
    %p56 = scmp.ne.s32.totalorder %s45, %s46
    %p57 = scmp.eq.s32.totalorder %s14, 0
    %p58 = por %p56, %p57
    %p59 = scmp.ne.s32.totalorder %s45, %s46
    %p60 = scmp.eq.s32.totalorder %s15, 35
    %p61 = por %p59, %p60
    %p63 = scmp.ne.s32.totalorder %s46, %s62
    %p64 = scmp.eq.s32.totalorder %s15, 0
    %p65 = por %p63, %p64
    %s66 = ssub.s32 %s18, %s27
    %p67 = scmp.eq.s32.totalorder %s66, 0
    %s69 = sadd.s32 %s68, 1
    %s70 = scalar_select %p67, %s68, %s69
    %p73 = pneg %p67
    %p74 = scmp.eq.s32.totalorder %s9, 35
    %p75 = por %p73, %p74
    %p76 = scmp.ne.s32.totalorder %s68, %s71
    %p77 = scmp.eq.s32.totalorder %s9, 0
    %p78 = por %p76, %p77
    %p79 = scmp.ne.s32.totalorder %s68, %s71
    %p80 = scmp.eq.s32.totalorder %s14, 35
    %p81 = por %p79, %p80
    %p82 = scmp.ne.s32.totalorder %s71, %s72
    %p83 = scmp.eq.s32.totalorder %s14, 0
    %p84 = por %p82, %p83
    %p85 = scmp.ne.s32.totalorder %s71, %s72
    %p86 = scmp.eq.s32.totalorder %s15, 35
    %p87 = por %p85, %p86
    %p89 = scmp.ne.s32.totalorder %s72, %s88
    %p90 = scmp.eq.s32.totalorder %s15, 0
    %p91 = por %p89, %p90
    %s93 = sadd.s32 %s92, 1
    %p96 = scmp.eq.s32.totalorder %s9, 35
    %p97 = scmp.ne.s32.totalorder %s92, %s94
    %p98 = scmp.eq.s32.totalorder %s9, 0
    %p99 = por %p97, %p98
    %p100 = scmp.ne.s32.totalorder %s92, %s94
    %p101 = scmp.eq.s32.totalorder %s14, 35
    %p102 = por %p100, %p101
    %p103 = scmp.ne.s32.totalorder %s94, %s95
    %p104 = scmp.eq.s32.totalorder %s14, 0
    %p105 = por %p103, %p104
    %p106 = scmp.ne.s32.totalorder %s94, %s95
    %p107 = scmp.eq.s32.totalorder %s15, 35
    %p108 = por %p106, %p107
    %p110 = scmp.ne.s32.totalorder %s95, %s109
    %p111 = scmp.eq.s32.totalorder %s15, 0
    %p112 = por %p110, %p111
    %s113 = ssub.s32 %s16, %s35
    %s114 = ssub.s32 %s17, %s31
    %s115 = sor.u32 %s113, %s114
    %p116 = scmp.eq.s32.totalorder %s115, 0
    %s118 = sadd.s32 %s117, 1
    %s119 = scalar_select %p116, %s117, %s118
    %p122 = pneg %p116
    %p123 = scmp.eq.s32.totalorder %s9, 35
    %p124 = por %p122, %p123
    %p125 = scmp.ne.s32.totalorder %s117, %s120
    %p126 = scmp.eq.s32.totalorder %s9, 0
    %p127 = por %p125, %p126
    %p128 = scmp.ne.s32.totalorder %s117, %s120
    %p129 = scmp.eq.s32.totalorder %s14, 35
    %p130 = por %p128, %p129
    %p131 = scmp.ne.s32.totalorder %s120, %s121
    %p132 = scmp.eq.s32.totalorder %s14, 0
    %p133 = por %p131, %p132
    %p134 = scmp.ne.s32.totalorder %s120, %s121
    %p135 = scmp.eq.s32.totalorder %s15, 35
    %p136 = por %p134, %p135
    %p138 = scmp.ne.s32.totalorder %s121, %s137
    %p139 = scmp.eq.s32.totalorder %s15, 0
    %p140 = por %p138, %p139
    %p141 = scmp.le.s32.totalorder 1, %s9
    %p142 = scmp.lt.s32.totalorder %s9, 37
    %p143 = pnand %p141, %p142
    %p144 = pneg %p143
    // Predicated region
    $region9: #{tpu_custom_call.1} parent=5 // pred_check
      _
    $region10: #{tpu_custom_call.1} parent=5 // pred_check_branch
      %146 = sbr.rel (%p143) target = $region12
    $region11: #{tpu_custom_call.1} parent=5 // pred_region
      %s147 = ssub.s32 %s9, 1
      // Predicated region
      $region13: #{tpu_custom_call.1} parent=11 // pred_check
        %p148 = pneg %p105
      $region14: #{tpu_custom_call.1} parent=11 // pred_check_branch
        %150 = sbr.rel (%p148) target = $region16
      $region15: #{tpu_custom_call.1} parent=11 // pred_region
        _
      $region16: #{tpu_custom_call.1} parent=11 // pred_fallthru
        _
    $region12: #{tpu_custom_call.1} parent=5 // pred_fallthru
      _
    %p151 = scmp.lt.s32.totalorder %s9, 36
    // Predicated region
    $region17: #{tpu_custom_call.1} parent=5 // pred_check
      %p152 = pneg %p151
    $region18: #{tpu_custom_call.1} parent=5 // pred_check_branch
      %154 = sbr.rel (%p152) target = $region20
    $region19: #{tpu_custom_call.1} parent=5 // pred_region
      // Predicated region
      $region21: #{tpu_custom_call.1} parent=19 // pred_check
        %p155 = pneg %p52
      $region22: #{tpu_custom_call.1} parent=19 // pred_check_branch
        %157 = sbr.rel (%p155) target = $region24
      $region23: #{tpu_custom_call.1} parent=19 // pred_region
        %s158 = sadd.s32 %s17, %s18
        %p159 = scmp.lt.s32.totalorder %s16, 1
        %s160 = scalar_select %p159, %s16, 1
        %p161 = scmp.lt.s32.totalorder %s158, 7
        %s162 = scalar_select %p161, %s158, 7
        %s163 = smul.addr %s162, 9
        %s164 = smul.addr %s160, 72
        %s165 = sadd.s32 %s163, %s164
        %s166 = smul.addr %s165, 8
        %s167 = scalar_lea.vmem %s0, %s166
        %s168 = sadd.s32 %s17, %s18
      $region24: #{tpu_custom_call.1} parent=19 // pred_fallthru
        _
      // Predicated region
      $region25: #{tpu_custom_call.1} parent=19 // pred_check
        %p169 = pneg %p78
      $region26: #{tpu_custom_call.1} parent=19 // pred_check_branch
        %171 = sbr.rel (%p169) target = $region28
      $region27: #{tpu_custom_call.1} parent=19 // pred_region
        %p172 = scmp.lt.s32.totalorder %s18, 2
        %s173 = scalar_select %p172, %s18, 2
        %s174 = smul.addr %s173, 9
        %s175 = smul.addr %s174, 4
        %s176 = scalar_lea.vmem %s1, %s175
      $region28: #{tpu_custom_call.1} parent=19 // pred_fallthru
        _
    $region20: #{tpu_custom_call.1} parent=5 // pred_fallthru
      _
    %p177 = scmp.le.s32.totalorder 1, %s9
    %p178 = scmp.lt.s32.totalorder %s9, 37
    %p179 = pnand %p177, %p178
    %p180 = pneg %p179
    // Predicated region
    $region29: #{tpu_custom_call.1} parent=5 // pred_check
      _
    $region30: #{tpu_custom_call.1} parent=5 // pred_check_branch
      %182 = sbr.rel (%p179) target = $region32
    $region31: #{tpu_custom_call.1} parent=5 // pred_region
      %s183 = ssub.s32 %s9, 1
      %s184 = sadd.s32 %s20, %s21
      %p185 = scmp.lt.s32.totalorder %s19, 1
      %s186 = scalar_select %p185, %s19, 1
      %p187 = scmp.lt.s32.totalorder %s184, 7
      %s188 = scalar_select %p187, %s184, 7
      %s189 = smul.addr %s188, 9
      %s190 = smul.addr %s186, 72
      %s191 = sadd.s32 %s189, %s190
      %s192 = smul.addr %s191, 8
      %s193 = scalar_lea.vmem %s0, %s192
      %p194 = pneg %p58
      %p195 = pneg %p55
      %p196 = scmp.lt.s32.totalorder %s21, 2
      %s197 = scalar_select %p196, %s21, 2
      %s198 = smul.addr %s197, 9
      %s199 = smul.addr %s198, 4
      %s200 = scalar_lea.vmem %s1, %s199
      %p201 = pneg %p84
      %p202 = pneg %p81
      %p203 = pneg %p105
      %p204 = pneg %p102
      %p205 = pneg %p133
      %p206 = pneg %p130
      %p207 = scmp.lt.s32.totalorder %s19, 1
      %s208 = scalar_select %p207, %s19, 1
      %p209 = scmp.lt.s32.totalorder %s20, 5
      %s210 = scalar_select %p209, %s20, 5
      %s211 = smul.addr %s210, 6
      %s212 = smul.addr %s208, 36
      %s213 = sadd.s32 %s211, %s212
      %s214 = smul.addr %s213, 8
      %s215 = scalar_lea.vmem %s3, %s214
      %s216 = sadd.s32 %s20, %s21
      %p217 = scmp.lt.s32.totalorder %s19, 1
      %s218 = scalar_select %p217, %s19, 1
      %p219 = scmp.lt.s32.totalorder %s216, 7
      %s220 = scalar_select %p219, %s216, 7
      %s221 = smul.addr %s220, 9
      %s222 = smul.addr %s218, 72
      %s223 = sadd.s32 %s221, %s222
      %s224 = smul.addr %s223, 8
      %s225 = scalar_lea.vmem %s0, %s224
      %s226 = sadd.s32 %s20, %s21
      %p227 = scmp.lt.s32.totalorder %s21, 2
      %s228 = scalar_select %p227, %s21, 2
      %s229 = smul.addr %s228, 9
      %s230 = smul.addr %s229, 4
      %s231 = scalar_lea.vmem %s1, %s230
      %p232 = scmp.lt.s32.totalorder %s19, 1
      %s233 = scalar_select %p232, %s19, 1
      %p234 = scmp.lt.s32.totalorder %s20, 5
      %s235 = scalar_select %p234, %s20, 5
      %s236 = smul.addr %s235, 6
      %s237 = smul.addr %s233, 36
      %s238 = sadd.s32 %s236, %s237
      %s239 = smul.addr %s238, 8
      %s240 = scalar_lea.vmem %s3, %s239
      %p241 = scmp.eq.s32.totalorder %s21, 0
      // Predicated region
      $region33: #{tpu_custom_call.1} parent=31 // pred_check
        %p242 = pneg %p241
      $region34: #{tpu_custom_call.1} parent=31 // pred_check_branch
        %244 = sbr.rel (%p242) target = $region36
      $region35: #{tpu_custom_call.1} parent=31 // pred_region
        %245 = vst [vmem:[#allocation2] sm:$0xff] 0.0
        %246 = vst [vmem:[#allocation2 + $0x8] sm:$0xff] 0.0
        %247 = vst [vmem:[#allocation2 + $0x10] sm:$0xff] 0.0
        %248 = vst [vmem:[#allocation2 + $0x18] sm:$0xff] 0.0
        %249 = vst [vmem:[#allocation2 + $0x20] sm:$0xff] 0.0
        %250 = vst [vmem:[#allocation2 + $0x28] sm:$0xff] 0.0
      $region36: #{tpu_custom_call.1} parent=31 // pred_fallthru
        _
      %v251 = vld [vmem:[#allocation2] sm:$0xff]
      %v252 = vld [vmem:[#allocation2 + $0x8] sm:$0xff]
      %v253 = vld [vmem:[#allocation2 + $0x10] sm:$0xff]
      %v254 = vld [vmem:[#allocation2 + $0x18] sm:$0xff]
      %v255 = vld [vmem:[#allocation2 + $0x20] sm:$0xff]
      %v256 = vld [vmem:[#allocation2 + $0x28] sm:$0xff]
      %v257 = vld [vmem:[%s225] sm:$0xff]
      %v258 = vld [vmem:[%s225 + $0x8] sm:$0xff]
      %v259 = vld [vmem:[%s225 + $0x10] sm:$0xff]
      %v260 = vld [vmem:[%s225 + $0x18] sm:$0xff]
      %v261 = vld [vmem:[%s225 + $0x20] sm:$0xff]
      %v262 = vld [vmem:[%s225 + $0x28] sm:$0xff]
      %v263 = vld [vmem:[%s231] sm:$0xf]
      %vm264 = vcmask 31744
      %v266 = vsel %vm264, %v257, 0
      %v269 = vsel %vm264, %v258, 0
      %v272 = vsel %vm264, %v259, 0
      %v275 = vsel %vm264, %v260, 0
      %v278 = vsel %vm264, %v261, 0
      %v281 = vsel %vm264, %v262, 0
      %vm283 = vcmask 1043456
      %v285 = vsel %vm283, %v263, 0
      %287 = vmatpush.msra.mxu0 0.0
      %288 = vmatpush.msra.mxu0 0.0
      %289 = vmatpush.msra.mxu0 0.0
      %290 = vmatpush.msra.mxu0 0.0
      %291 = vmatpush.msra.mxu0 0.0
      %292 = vmatpush.msra.mxu0 0.0
      %293 = vmatpush.msra.mxu0 0.0
      %294 = vmatpush.msra.mxu0 0.0
      %295 = vmatpush.msra.mxu0 0.0
      %296 = vmatpush.msra.mxu0 0.0
      %297 = vmatpush.msra.mxu0 0.0
      %298 = vmatpush.msra.mxu0 0.0
      %299 = vmatpush.msra.mxu0 0.0
      %300 = vmatpush.msra.mxu0 0.0
      %301 = vmatpush.msra.mxu0 0.0
      %302 = vmatpush.msra.mxu0 %v285
      %303 = vmatmul.f32.gmra.mxu0 %v266
      %v304 = vpop.f32.mrf.mxu0
      %v305 = vadd.f32 0.0, %v304
      %306 = vmatmul.f32.gmra.mxu0 %v269
      %v307 = vpop.f32.mrf.mxu0
      %v308 = vadd.f32 0.0, %v307
      %309 = vmatmul.f32.gmra.mxu0 %v272
      %v310 = vpop.f32.mrf.mxu0
      %v311 = vadd.f32 0.0, %v310
      %312 = vmatmul.f32.gmra.mxu0 %v275
      %v313 = vpop.f32.mrf.mxu0
      %v314 = vadd.f32 0.0, %v313
      %315 = vmatmul.f32.gmra.mxu0 %v278
      %v316 = vpop.f32.mrf.mxu0
      %v317 = vadd.f32 0.0, %v316
      %318 = vmatmul.f32.gmra.mxu0 %v281
      %v319 = vpop.f32.mrf.mxu0
      %v320 = vadd.f32 0.0, %v319
      %321 = vdwg.mxu0
      %v322 = vadd.f32 %v251, %v305
      %v323 = vadd.f32 %v252, %v308
      %v324 = vadd.f32 %v253, %v311
      %v325 = vadd.f32 %v254, %v314
      %v326 = vadd.f32 %v255, %v317
      %v327 = vadd.f32 %v256, %v320
      %v328 = vld [vmem:[%s225 + $0x1] sm:$0xff]
      %v329 = vld [vmem:[%s225 + $0x9] sm:$0xff]
      %v330 = vld [vmem:[%s225 + $0x11] sm:$0xff]
      %v331 = vld [vmem:[%s225 + $0x19] sm:$0xff]
      %v332 = vld [vmem:[%s225 + $0x21] sm:$0xff]
      %v333 = vld [vmem:[%s225 + $0x29] sm:$0xff]
      %s334 = scalar_lea.vmem %s231, 4
      %v335 = vld [vmem:[%s334] sm:$0xf]
      %v337 = vsel %vm264, %v328, 0
      %v340 = vsel %vm264, %v329, 0
      %v343 = vsel %vm264, %v330, 0
      %v346 = vsel %vm264, %v331, 0
      %v349 = vsel %vm264, %v332, 0
      %v352 = vsel %vm264, %v333, 0
      %v355 = vsel %vm283, %v335, 0
      %357 = vmatpush.msra.mxu0 0.0
      %358 = vmatpush.msra.mxu0 0.0
      %359 = vmatpush.msra.mxu0 0.0
      %360 = vmatpush.msra.mxu0 0.0
      %361 = vmatpush.msra.mxu0 0.0
      %362 = vmatpush.msra.mxu0 0.0
      %363 = vmatpush.msra.mxu0 0.0
      %364 = vmatpush.msra.mxu0 0.0
      %365 = vmatpush.msra.mxu0 0.0
      %366 = vmatpush.msra.mxu0 0.0
      %367 = vmatpush.msra.mxu0 0.0
      %368 = vmatpush.msra.mxu0 0.0
      %369 = vmatpush.msra.mxu0 0.0
      %370 = vmatpush.msra.mxu0 0.0
      %371 = vmatpush.msra.mxu0 0.0
      %372 = vmatpush.msra.mxu0 %v355
      %373 = vmatmul.f32.gmra.mxu0 %v337
      %v374 = vpop.f32.mrf.mxu0
      %v375 = vadd.f32 0.0, %v374
      %376 = vmatmul.f32.gmra.mxu0 %v340
      %v377 = vpop.f32.mrf.mxu0
      %v378 = vadd.f32 0.0, %v377
      %379 = vmatmul.f32.gmra.mxu0 %v343
      %v380 = vpop.f32.mrf.mxu0
      %v381 = vadd.f32 0.0, %v380
      %382 = vmatmul.f32.gmra.mxu0 %v346
      %v383 = vpop.f32.mrf.mxu0
      %v384 = vadd.f32 0.0, %v383
      %385 = vmatmul.f32.gmra.mxu0 %v349
      %v386 = vpop.f32.mrf.mxu0
      %v387 = vadd.f32 0.0, %v386
      %388 = vmatmul.f32.gmra.mxu0 %v352
      %v389 = vpop.f32.mrf.mxu0
      %v390 = vadd.f32 0.0, %v389
      %391 = vdwg.mxu0
      %v392 = vadd.f32 %v322, %v375
      %v393 = vadd.f32 %v323, %v378
      %v394 = vadd.f32 %v324, %v381
      %v395 = vadd.f32 %v325, %v384
      %v396 = vadd.f32 %v326, %v387
      %v397 = vadd.f32 %v327, %v390
      %v398 = vld [vmem:[%s225 + $0x2] sm:$0xff]
      %v399 = vld [vmem:[%s225 + $0xa] sm:$0xff]
      %v400 = vld [vmem:[%s225 + $0x12] sm:$0xff]
      %v401 = vld [vmem:[%s225 + $0x1a] sm:$0xff]
      %v402 = vld [vmem:[%s225 + $0x22] sm:$0xff]
      %v403 = vld [vmem:[%s225 + $0x2a] sm:$0xff]
      %s404 = scalar_lea.vmem %s231, 8
      %v405 = vld [vmem:[%s404] sm:$0xf]
      %v407 = vsel %vm264, %v398, 0
      %v410 = vsel %vm264, %v399, 0
      %v413 = vsel %vm264, %v400, 0
      %v416 = vsel %vm264, %v401, 0
      %v419 = vsel %vm264, %v402, 0
      %v422 = vsel %vm264, %v403, 0
      %v425 = vsel %vm283, %v405, 0
      %427 = vmatpush.msra.mxu0 0.0
      %428 = vmatpush.msra.mxu0 0.0
      %429 = vmatpush.msra.mxu0 0.0
      %430 = vmatpush.msra.mxu0 0.0
      %431 = vmatpush.msra.mxu0 0.0
      %432 = vmatpush.msra.mxu0 0.0
      %433 = vmatpush.msra.mxu0 0.0
      %434 = vmatpush.msra.mxu0 0.0
      %435 = vmatpush.msra.mxu0 0.0
      %436 = vmatpush.msra.mxu0 0.0
      %437 = vmatpush.msra.mxu0 0.0
      %438 = vmatpush.msra.mxu0 0.0
      %439 = vmatpush.msra.mxu0 0.0
      %440 = vmatpush.msra.mxu0 0.0
      %441 = vmatpush.msra.mxu0 0.0
      %442 = vmatpush.msra.mxu0 %v425
      %443 = vmatmul.f32.gmra.mxu0 %v407
      %v444 = vpop.f32.mrf.mxu0
      %v445 = vadd.f32 0.0, %v444
      %446 = vmatmul.f32.gmra.mxu0 %v410
      %v447 = vpop.f32.mrf.mxu0
      %v448 = vadd.f32 0.0, %v447
      %449 = vmatmul.f32.gmra.mxu0 %v413
      %v450 = vpop.f32.mrf.mxu0
      %v451 = vadd.f32 0.0, %v450
      %452 = vmatmul.f32.gmra.mxu0 %v416
      %v453 = vpop.f32.mrf.mxu0
      %v454 = vadd.f32 0.0, %v453
      %455 = vmatmul.f32.gmra.mxu0 %v419
      %v456 = vpop.f32.mrf.mxu0
      %v457 = vadd.f32 0.0, %v456
      %458 = vmatmul.f32.gmra.mxu0 %v422
      %v459 = vpop.f32.mrf.mxu0
      %v460 = vadd.f32 0.0, %v459
      %461 = vdwg.mxu0
      %v462 = vadd.f32 %v392, %v445
      %v463 = vadd.f32 %v393, %v448
      %v464 = vadd.f32 %v394, %v451
      %v465 = vadd.f32 %v395, %v454
      %v466 = vadd.f32 %v396, %v457
      %v467 = vadd.f32 %v397, %v460
      %v468 = vld [vmem:[%s225 + $0x8] sm:$0xff]
      %v469 = vld [vmem:[%s225 + $0x10] sm:$0xff]
      %v470 = vld [vmem:[%s225 + $0x18] sm:$0xff]
      %v471 = vld [vmem:[%s225 + $0x20] sm:$0xff]
      %v472 = vld [vmem:[%s225 + $0x28] sm:$0xff]
      %v473 = vld [vmem:[%s225 + $0x30] sm:$0xff]
      %s474 = scalar_lea.vmem %s231, 12
      %v475 = vld [vmem:[%s474] sm:$0xf]
      %v477 = vsel %vm264, %v468, 0
      %v480 = vsel %vm264, %v469, 0
      %v483 = vsel %vm264, %v470, 0
      %v486 = vsel %vm264, %v471, 0
      %v489 = vsel %vm264, %v472, 0
      %v492 = vsel %vm264, %v473, 0
      %v495 = vsel %vm283, %v475, 0
      %497 = vmatpush.msra.mxu0 0.0
      %498 = vmatpush.msra.mxu0 0.0
      %499 = vmatpush.msra.mxu0 0.0
      %500 = vmatpush.msra.mxu0 0.0
      %501 = vmatpush.msra.mxu0 0.0
      %502 = vmatpush.msra.mxu0 0.0
      %503 = vmatpush.msra.mxu0 0.0
      %504 = vmatpush.msra.mxu0 0.0
      %505 = vmatpush.msra.mxu0 0.0
      %506 = vmatpush.msra.mxu0 0.0
      %507 = vmatpush.msra.mxu0 0.0
      %508 = vmatpush.msra.mxu0 0.0
      %509 = vmatpush.msra.mxu0 0.0
      %510 = vmatpush.msra.mxu0 0.0
      %511 = vmatpush.msra.mxu0 0.0
      %512 = vmatpush.msra.mxu0 %v495
      %513 = vmatmul.f32.gmra.mxu0 %v477
      %v514 = vpop.f32.mrf.mxu0
      %v515 = vadd.f32 0.0, %v514
      %516 = vmatmul.f32.gmra.mxu0 %v480
      %v517 = vpop.f32.mrf.mxu0
      %v518 = vadd.f32 0.0, %v517
      %519 = vmatmul.f32.gmra.mxu0 %v483
      %v520 = vpop.f32.mrf.mxu0
      %v521 = vadd.f32 0.0, %v520
      %522 = vmatmul.f32.gmra.mxu0 %v486
      %v523 = vpop.f32.mrf.mxu0
      %v524 = vadd.f32 0.0, %v523
      %525 = vmatmul.f32.gmra.mxu0 %v489
      %v526 = vpop.f32.mrf.mxu0
      %v527 = vadd.f32 0.0, %v526
      %528 = vmatmul.f32.gmra.mxu0 %v492
      %v529 = vpop.f32.mrf.mxu0
      %v530 = vadd.f32 0.0, %v529
      %531 = vdwg.mxu0
      %v532 = vadd.f32 %v462, %v515
      %v533 = vadd.f32 %v463, %v518
      %v534 = vadd.f32 %v464, %v521
      %v535 = vadd.f32 %v465, %v524
      %v536 = vadd.f32 %v466, %v527
      %v537 = vadd.f32 %v467, %v530
      %v538 = vld [vmem:[%s225 + $0x9] sm:$0xff]
      %v539 = vld [vmem:[%s225 + $0x11] sm:$0xff]
      %v540 = vld [vmem:[%s225 + $0x19] sm:$0xff]
      %v541 = vld [vmem:[%s225 + $0x21] sm:$0xff]
      %v542 = vld [vmem:[%s225 + $0x29] sm:$0xff]
      %v543 = vld [vmem:[%s225 + $0x31] sm:$0xff]
      %s544 = scalar_lea.vmem %s231, 16
      %v545 = vld [vmem:[%s544] sm:$0xf]
      %v547 = vsel %vm264, %v538, 0
      %v550 = vsel %vm264, %v539, 0
      %v553 = vsel %vm264, %v540, 0
      %v556 = vsel %vm264, %v541, 0
      %v559 = vsel %vm264, %v542, 0
      %v562 = vsel %vm264, %v543, 0
      %v565 = vsel %vm283, %v545, 0
      %567 = vmatpush.msra.mxu0 0.0
      %568 = vmatpush.msra.mxu0 0.0
      %569 = vmatpush.msra.mxu0 0.0
      %570 = vmatpush.msra.mxu0 0.0
      %571 = vmatpush.msra.mxu0 0.0
      %572 = vmatpush.msra.mxu0 0.0
      %573 = vmatpush.msra.mxu0 0.0
      %574 = vmatpush.msra.mxu0 0.0
      %575 = vmatpush.msra.mxu0 0.0
      %576 = vmatpush.msra.mxu0 0.0
      %577 = vmatpush.msra.mxu0 0.0
      %578 = vmatpush.msra.mxu0 0.0
      %579 = vmatpush.msra.mxu0 0.0
      %580 = vmatpush.msra.mxu0 0.0
      %581 = vmatpush.msra.mxu0 0.0
      %582 = vmatpush.msra.mxu0 %v565
      %583 = vmatmul.f32.gmra.mxu0 %v547
      %v584 = vpop.f32.mrf.mxu0
      %v585 = vadd.f32 0.0, %v584
      %586 = vmatmul.f32.gmra.mxu0 %v550
      %v587 = vpop.f32.mrf.mxu0
      %v588 = vadd.f32 0.0, %v587
      %589 = vmatmul.f32.gmra.mxu0 %v553
      %v590 = vpop.f32.mrf.mxu0
      %v591 = vadd.f32 0.0, %v590
      %592 = vmatmul.f32.gmra.mxu0 %v556
      %v593 = vpop.f32.mrf.mxu0
      %v594 = vadd.f32 0.0, %v593
      %595 = vmatmul.f32.gmra.mxu0 %v559
      %v596 = vpop.f32.mrf.mxu0
      %v597 = vadd.f32 0.0, %v596
      %598 = vmatmul.f32.gmra.mxu0 %v562
      %v599 = vpop.f32.mrf.mxu0
      %v600 = vadd.f32 0.0, %v599
      %601 = vdwg.mxu0
      %v602 = vadd.f32 %v532, %v585
      %v603 = vadd.f32 %v533, %v588
      %v604 = vadd.f32 %v534, %v591
      %v605 = vadd.f32 %v535, %v594
      %v606 = vadd.f32 %v536, %v597
      %v607 = vadd.f32 %v537, %v600
      %v608 = vld [vmem:[%s225 + $0xa] sm:$0xff]
      %v609 = vld [vmem:[%s225 + $0x12] sm:$0xff]
      %v610 = vld [vmem:[%s225 + $0x1a] sm:$0xff]
      %v611 = vld [vmem:[%s225 + $0x22] sm:$0xff]
      %v612 = vld [vmem:[%s225 + $0x2a] sm:$0xff]
      %v613 = vld [vmem:[%s225 + $0x32] sm:$0xff]
      %s614 = scalar_lea.vmem %s231, 20
      %v615 = vld [vmem:[%s614] sm:$0xf]
      %v617 = vsel %vm264, %v608, 0
      %v620 = vsel %vm264, %v609, 0
      %v623 = vsel %vm264, %v610, 0
      %v626 = vsel %vm264, %v611, 0
      %v629 = vsel %vm264, %v612, 0
      %v632 = vsel %vm264, %v613, 0
      %v635 = vsel %vm283, %v615, 0
      %637 = vmatpush.msra.mxu0 0.0
      %638 = vmatpush.msra.mxu0 0.0
      %639 = vmatpush.msra.mxu0 0.0
      %640 = vmatpush.msra.mxu0 0.0
      %641 = vmatpush.msra.mxu0 0.0
      %642 = vmatpush.msra.mxu0 0.0
      %643 = vmatpush.msra.mxu0 0.0
      %644 = vmatpush.msra.mxu0 0.0
      %645 = vmatpush.msra.mxu0 0.0
      %646 = vmatpush.msra.mxu0 0.0
      %647 = vmatpush.msra.mxu0 0.0
      %648 = vmatpush.msra.mxu0 0.0
      %649 = vmatpush.msra.mxu0 0.0
      %650 = vmatpush.msra.mxu0 0.0
      %651 = vmatpush.msra.mxu0 0.0
      %652 = vmatpush.msra.mxu0 %v635
      %653 = vmatmul.f32.gmra.mxu0 %v617
      %v654 = vpop.f32.mrf.mxu0
      %v655 = vadd.f32 0.0, %v654
      %656 = vmatmul.f32.gmra.mxu0 %v620
      %v657 = vpop.f32.mrf.mxu0
      %v658 = vadd.f32 0.0, %v657
      %659 = vmatmul.f32.gmra.mxu0 %v623
      %v660 = vpop.f32.mrf.mxu0
      %v661 = vadd.f32 0.0, %v660
      %662 = vmatmul.f32.gmra.mxu0 %v626
      %v663 = vpop.f32.mrf.mxu0
      %v664 = vadd.f32 0.0, %v663
      %665 = vmatmul.f32.gmra.mxu0 %v629
      %v666 = vpop.f32.mrf.mxu0
      %v667 = vadd.f32 0.0, %v666
      %668 = vmatmul.f32.gmra.mxu0 %v632
      %v669 = vpop.f32.mrf.mxu0
      %v670 = vadd.f32 0.0, %v669
      %671 = vdwg.mxu0
      %v672 = vadd.f32 %v602, %v655
      %v673 = vadd.f32 %v603, %v658
      %v674 = vadd.f32 %v604, %v661
      %v675 = vadd.f32 %v605, %v664
      %v676 = vadd.f32 %v606, %v667
      %v677 = vadd.f32 %v607, %v670
      %v678 = vld [vmem:[%s225 + $0x10] sm:$0xff]
      %v679 = vld [vmem:[%s225 + $0x18] sm:$0xff]
      %v680 = vld [vmem:[%s225 + $0x20] sm:$0xff]
      %v681 = vld [vmem:[%s225 + $0x28] sm:$0xff]
      %v682 = vld [vmem:[%s225 + $0x30] sm:$0xff]
      %v683 = vld [vmem:[%s225 + $0x38] sm:$0xff]
      %s684 = scalar_lea.vmem %s231, 24
      %v685 = vld [vmem:[%s684] sm:$0xf]
      %v687 = vsel %vm264, %v678, 0
      %v690 = vsel %vm264, %v679, 0
      %v693 = vsel %vm264, %v680, 0
      %v696 = vsel %vm264, %v681, 0
      %v699 = vsel %vm264, %v682, 0
      %v702 = vsel %vm264, %v683, 0
      %v705 = vsel %vm283, %v685, 0
      %707 = vmatpush.msra.mxu0 0.0
      %708 = vmatpush.msra.mxu0 0.0
      %709 = vmatpush.msra.mxu0 0.0
      %710 = vmatpush.msra.mxu0 0.0
      %711 = vmatpush.msra.mxu0 0.0
      %712 = vmatpush.msra.mxu0 0.0
      %713 = vmatpush.msra.mxu0 0.0
      %714 = vmatpush.msra.mxu0 0.0
      %715 = vmatpush.msra.mxu0 0.0
      %716 = vmatpush.msra.mxu0 0.0
      %717 = vmatpush.msra.mxu0 0.0
      %718 = vmatpush.msra.mxu0 0.0
      %719 = vmatpush.msra.mxu0 0.0
      %720 = vmatpush.msra.mxu0 0.0
      %721 = vmatpush.msra.mxu0 0.0
      %722 = vmatpush.msra.mxu0 %v705
      %723 = vmatmul.f32.gmra.mxu0 %v687
      %v724 = vpop.f32.mrf.mxu0
      %v725 = vadd.f32 0.0, %v724
      %726 = vmatmul.f32.gmra.mxu0 %v690
      %v727 = vpop.f32.mrf.mxu0
      %v728 = vadd.f32 0.0, %v727
      %729 = vmatmul.f32.gmra.mxu0 %v693
      %v730 = vpop.f32.mrf.mxu0
      %v731 = vadd.f32 0.0, %v730
      %732 = vmatmul.f32.gmra.mxu0 %v696
      %v733 = vpop.f32.mrf.mxu0
      %v734 = vadd.f32 0.0, %v733
      %735 = vmatmul.f32.gmra.mxu0 %v699
      %v736 = vpop.f32.mrf.mxu0
      %v737 = vadd.f32 0.0, %v736
      %738 = vmatmul.f32.gmra.mxu0 %v702
      %v739 = vpop.f32.mrf.mxu0
      %v740 = vadd.f32 0.0, %v739
      %741 = vdwg.mxu0
      %v742 = vadd.f32 %v672, %v725
      %v743 = vadd.f32 %v673, %v728
      %v744 = vadd.f32 %v674, %v731
      %v745 = vadd.f32 %v675, %v734
      %v746 = vadd.f32 %v676, %v737
      %v747 = vadd.f32 %v677, %v740
      %v748 = vld [vmem:[%s225 + $0x11] sm:$0xff]
      %v749 = vld [vmem:[%s225 + $0x19] sm:$0xff]
      %v750 = vld [vmem:[%s225 + $0x21] sm:$0xff]
      %v751 = vld [vmem:[%s225 + $0x29] sm:$0xff]
      %v752 = vld [vmem:[%s225 + $0x31] sm:$0xff]
      %v753 = vld [vmem:[%s225 + $0x39] sm:$0xff]
      %s754 = scalar_lea.vmem %s231, 28
      %v755 = vld [vmem:[%s754] sm:$0xf]
      %v757 = vsel %vm264, %v748, 0
      %v760 = vsel %vm264, %v749, 0
      %v763 = vsel %vm264, %v750, 0
      %v766 = vsel %vm264, %v751, 0
      %v769 = vsel %vm264, %v752, 0
      %v772 = vsel %vm264, %v753, 0
      %v775 = vsel %vm283, %v755, 0
      %777 = vmatpush.msra.mxu0 0.0
      %778 = vmatpush.msra.mxu0 0.0
      %779 = vmatpush.msra.mxu0 0.0
      %780 = vmatpush.msra.mxu0 0.0
      %781 = vmatpush.msra.mxu0 0.0
      %782 = vmatpush.msra.mxu0 0.0
      %783 = vmatpush.msra.mxu0 0.0
      %784 = vmatpush.msra.mxu0 0.0
      %785 = vmatpush.msra.mxu0 0.0
      %786 = vmatpush.msra.mxu0 0.0
      %787 = vmatpush.msra.mxu0 0.0
      %788 = vmatpush.msra.mxu0 0.0
      %789 = vmatpush.msra.mxu0 0.0
      %790 = vmatpush.msra.mxu0 0.0
      %791 = vmatpush.msra.mxu0 0.0
      %792 = vmatpush.msra.mxu0 %v775
      %793 = vmatmul.f32.gmra.mxu0 %v757
      %v794 = vpop.f32.mrf.mxu0
      %v795 = vadd.f32 0.0, %v794
      %796 = vmatmul.f32.gmra.mxu0 %v760
      %v797 = vpop.f32.mrf.mxu0
      %v798 = vadd.f32 0.0, %v797
      %799 = vmatmul.f32.gmra.mxu0 %v763
      %v800 = vpop.f32.mrf.mxu0
      %v801 = vadd.f32 0.0, %v800
      %802 = vmatmul.f32.gmra.mxu0 %v766
      %v803 = vpop.f32.mrf.mxu0
      %v804 = vadd.f32 0.0, %v803
      %805 = vmatmul.f32.gmra.mxu0 %v769
      %v806 = vpop.f32.mrf.mxu0
      %v807 = vadd.f32 0.0, %v806
      %808 = vmatmul.f32.gmra.mxu0 %v772
      %v809 = vpop.f32.mrf.mxu0
      %v810 = vadd.f32 0.0, %v809
      %811 = vdwg.mxu0
      %v812 = vadd.f32 %v742, %v795
      %v813 = vadd.f32 %v743, %v798
      %v814 = vadd.f32 %v744, %v801
      %v815 = vadd.f32 %v745, %v804
      %v816 = vadd.f32 %v746, %v807
      %v817 = vadd.f32 %v747, %v810
      %v818 = vld [vmem:[%s225 + $0x12] sm:$0xff]
      %v819 = vld [vmem:[%s225 + $0x1a] sm:$0xff]
      %v820 = vld [vmem:[%s225 + $0x22] sm:$0xff]
      %v821 = vld [vmem:[%s225 + $0x2a] sm:$0xff]
      %v822 = vld [vmem:[%s225 + $0x32] sm:$0xff]
      %v823 = vld [vmem:[%s225 + $0x3a] sm:$0xff]
      %s824 = scalar_lea.vmem %s231, 32
      %v825 = vld [vmem:[%s824] sm:$0xf]
      %v827 = vsel %vm264, %v818, 0
      %v830 = vsel %vm264, %v819, 0
      %v833 = vsel %vm264, %v820, 0
      %v836 = vsel %vm264, %v821, 0
      %v839 = vsel %vm264, %v822, 0
      %v842 = vsel %vm264, %v823, 0
      %v845 = vsel %vm283, %v825, 0
      %847 = vmatpush.msra.mxu0 0.0
      %848 = vmatpush.msra.mxu0 0.0
      %849 = vmatpush.msra.mxu0 0.0
      %850 = vmatpush.msra.mxu0 0.0
      %851 = vmatpush.msra.mxu0 0.0
      %852 = vmatpush.msra.mxu0 0.0
      %853 = vmatpush.msra.mxu0 0.0
      %854 = vmatpush.msra.mxu0 0.0
      %855 = vmatpush.msra.mxu0 0.0
      %856 = vmatpush.msra.mxu0 0.0
      %857 = vmatpush.msra.mxu0 0.0
      %858 = vmatpush.msra.mxu0 0.0
      %859 = vmatpush.msra.mxu0 0.0
      %860 = vmatpush.msra.mxu0 0.0
      %861 = vmatpush.msra.mxu0 0.0
      %862 = vmatpush.msra.mxu0 %v845
      %863 = vmatmul.f32.gmra.mxu0 %v827
      %v864 = vpop.f32.mrf.mxu0
      %v865 = vadd.f32 0.0, %v864
      %866 = vmatmul.f32.gmra.mxu0 %v830
      %v867 = vpop.f32.mrf.mxu0
      %v868 = vadd.f32 0.0, %v867
      %869 = vmatmul.f32.gmra.mxu0 %v833
      %v870 = vpop.f32.mrf.mxu0
      %v871 = vadd.f32 0.0, %v870
      %872 = vmatmul.f32.gmra.mxu0 %v836
      %v873 = vpop.f32.mrf.mxu0
      %v874 = vadd.f32 0.0, %v873
      %875 = vmatmul.f32.gmra.mxu0 %v839
      %v876 = vpop.f32.mrf.mxu0
      %v877 = vadd.f32 0.0, %v876
      %878 = vmatmul.f32.gmra.mxu0 %v842
      %v879 = vpop.f32.mrf.mxu0
      %v880 = vadd.f32 0.0, %v879
      %881 = vdwg.mxu0
      %v882 = vadd.f32 %v812, %v865
      %v883 = vadd.f32 %v813, %v868
      %v884 = vadd.f32 %v814, %v871
      %v885 = vadd.f32 %v815, %v874
      %v886 = vadd.f32 %v816, %v877
      %v887 = vadd.f32 %v817, %v880
      %888 = vst [vmem:[#allocation2] sm:$0xff] %v882
      %889 = vst [vmem:[#allocation2 + $0x8] sm:$0xff] %v883
      %890 = vst [vmem:[#allocation2 + $0x10] sm:$0xff] %v884
      %891 = vst [vmem:[#allocation2 + $0x18] sm:$0xff] %v885
      %892 = vst [vmem:[#allocation2 + $0x20] sm:$0xff] %v886
      %893 = vst [vmem:[#allocation2 + $0x28] sm:$0xff] %v887
      %p894 = scmp.eq.s32.totalorder %s21, 2
      // Predicated region
      $region37: #{tpu_custom_call.1} parent=31 // pred_check
        %p895 = pneg %p894
      $region38: #{tpu_custom_call.1} parent=31 // pred_check_branch
        %897 = sbr.rel (%p895) target = $region40
      $region39: #{tpu_custom_call.1} parent=31 // pred_region
        %v898 = vld [vmem:[%s2] sm:$0x1]
        %v899 = vld [vmem:[#allocation2] sm:$0x3f]
        %v901 = vperm.slane %v898, 0
        %v903 = vadd.f32 %v899, %v901
        %904 = vst [vmem:[%s240] sm:$0x3f] %v903
        %v905 = vld [vmem:[#allocation2 + $0x8] sm:$0x3f]
        %v906 = vadd.f32 %v905, %v901
        %s907 = scalar_lea.vmem %s240, 8
        %908 = vst [vmem:[%s907] sm:$0x3f] %v906
        %v909 = vld [vmem:[#allocation2 + $0x10] sm:$0x3f]
        %v910 = vadd.f32 %v909, %v901
        %s911 = scalar_lea.vmem %s240, 16
        %912 = vst [vmem:[%s911] sm:$0x3f] %v910
        %v913 = vld [vmem:[#allocation2 + $0x18] sm:$0x3f]
        %v914 = vadd.f32 %v913, %v901
        %s915 = scalar_lea.vmem %s240, 24
        %916 = vst [vmem:[%s915] sm:$0x3f] %v914
        %v917 = vld [vmem:[#allocation2 + $0x20] sm:$0x3f]
        %v918 = vadd.f32 %v917, %v901
        %s919 = scalar_lea.vmem %s240, 32
        %920 = vst [vmem:[%s919] sm:$0x3f] %v918
        %v921 = vld [vmem:[#allocation2 + $0x28] sm:$0x3f]
        %v922 = vadd.f32 %v921, %v901
        %s923 = scalar_lea.vmem %s240, 40
        %924 = vst [vmem:[%s923] sm:$0x3f] %v922
      $region40: #{tpu_custom_call.1} parent=31 // pred_fallthru
        _
      %p925 = scmp.lt.s32.totalorder %s19, 1
      %s926 = scalar_select %p925, %s19, 1
      %p927 = scmp.lt.s32.totalorder %s20, 5
      %s928 = scalar_select %p927, %s20, 5
      %s929 = smul.addr %s928, 6
      %s930 = smul.addr %s926, 36
      %s931 = sadd.s32 %s929, %s930
      %s932 = smul.addr %s931, 8
      %s933 = scalar_lea.vmem %s3, %s932
      // Predicated region
      $region41: #{tpu_custom_call.1} parent=31 // pred_check
        %p934 = pneg %p130
      $region42: #{tpu_custom_call.1} parent=31 // pred_check_branch
        %936 = sbr.rel (%p934) target = $region44
      $region43: #{tpu_custom_call.1} parent=31 // pred_region
        _
      $region44: #{tpu_custom_call.1} parent=31 // pred_fallthru
        _
    $region32: #{tpu_custom_call.1} parent=5 // pred_fallthru
      _
    %p937 = scmp.le.s32.totalorder 2, %s9
    // Predicated region
    $region45: #{tpu_custom_call.1} parent=5 // pred_check
      %p938 = pneg %p937
    $region46: #{tpu_custom_call.1} parent=5 // pred_check_branch
      %940 = sbr.rel (%p938) target = $region48
    $region47: #{tpu_custom_call.1} parent=5 // pred_region
      %s941 = ssub.s32 %s9, 2
      // Predicated region
      $region49: #{tpu_custom_call.1} parent=47 // pred_check
        %p942 = pneg %p136
      $region50: #{tpu_custom_call.1} parent=47 // pred_check_branch
        %944 = sbr.rel (%p942) target = $region52
      $region51: #{tpu_custom_call.1} parent=47 // pred_region
        %p945 = scmp.lt.s32.totalorder %s22, 1
        %s946 = scalar_select %p945, %s22, 1
        %p947 = scmp.lt.s32.totalorder %s23, 5
        %s948 = scalar_select %p947, %s23, 5
        %s949 = smul.addr %s948, 6
        %s950 = smul.addr %s946, 36
        %s951 = sadd.s32 %s949, %s950
        %s952 = smul.addr %s951, 8
        %s953 = scalar_lea.vmem %s3, %s952
      $region52: #{tpu_custom_call.1} parent=47 // pred_fallthru
        _
    $region48: #{tpu_custom_call.1} parent=5 // pred_fallthru
      _
  $region6: #{tpu_custom_call.1} parent=0 // loop_footer
    %s13 = sadd.s32 1, %s9
  $region7: #{tpu_custom_call.1} parent=0 // loop_footer_branch
    %8 = sbr.rel target = $region3
  $region8: #{tpu_custom_call.1} parent=0 // loop_exit
    _

</llo_original>
